<compile_context>
chip_gen: v6e
topology: v6e:2x2x1
jax: 0.10.0
libtpu: 0.0.40
codegen_flags: <defaults>
</compile_context>

<pallas_src>
import math

import jax
import jax.numpy as jnp
from jax.experimental import pallas as pl
from jax.experimental.pallas import tpu as pltpu


# ---------------------------------------------------------------------------
# Kernel
# ---------------------------------------------------------------------------
def _make_kernel(tile_rows, W, K):
    TH = tile_rows

    def kernel(x_ref, wf_ref, bf_ref, wct_ref, bct_ref, out_ref):
        # x_ref:   (1, H+2, W+2, 2C)   bf16  zero-padded fused (rgb|ddd) image
        # wf_ref:  (K, hidden)         bf16  fused two-branch 3x3 weights
        # bf_ref:  (1, hidden)         f32   fused branch bias
        # wct_ref: (n_class, hidden)   bf16  classifier weight (pre-transposed)
        # bct_ref: (n_class, 1)        f32   classifier bias
        # out_ref: (1, n_class, TH*W)  f32   lane-dense logits for this row tile
        r0 = pl.multiple_of(pl.program_id(1) * TH, TH)

        # Rows [r0, r0 + TH + 2) of the padded image cover this tile + halo.
        rows = x_ref[0, pl.ds(r0, TH + 2), :, :].astype(jnp.float32)

        # In-kernel im2col: 9 shifted (TH, W, 2C) views -> (TH*W, 9*2C).
        taps = [rows[dy:dy + TH, dx:dx + W, :]
                for dy in range(3) for dx in range(3)]
        patches = jnp.concatenate(taps, axis=-1)        # (TH, W, K)
        # W % 8 == 0 -> this collapse keeps the lane dim and is layout-cheap.
        patches = patches.reshape(TH * W, K)

        # Fused two-branch 3x3 conv as a single MXU matmul, f32 accumulation.
        feat = jnp.dot(patches.astype(jnp.bfloat16), wf_ref[...],
                       preferred_element_type=jnp.float32)      # (TH*W, hidden)
        feat = jnp.maximum(feat + bf_ref[...], 0.0)

        # 1x1 classifier, produced directly in lane-dense (n_class, TH*W).
        feat_t = jnp.transpose(feat)                            # (hidden, TH*W)
        logits_t = jnp.dot(wct_ref[...].astype(jnp.float32), feat_t,
                           preferred_element_type=jnp.float32)  # (n_class, TH*W)
        out_ref[0] = (logits_t + bct_ref[...]).astype(out_ref.dtype)

    return kernel


# ---------------------------------------------------------------------------
# Wrapper
# ---------------------------------------------------------------------------
def _fuse_params(params):
    """Fold the two branch convs into one weight/bias; pre-transpose the classifier."""
    K_branch, hidden = params["w_rgb"].shape
    cin = K_branch // 9
    w_rgb = params["w_rgb"].reshape(9, cin, hidden)
    w_ddd = params["w_ddd"].reshape(9, cin, hidden)
    # Per 3x3 tap: [rgb channels | ddd channels], matching the fused input image.
    w_fused = jnp.concatenate([w_rgb, w_ddd], axis=1).reshape(9 * 2 * cin, hidden)
    b_fused = (params["b_rgb"] + params["b_ddd"]).astype(jnp.float32)
    w_cls_t = jnp.transpose(params["w_cls"])               # (n_class, hidden)
    b_cls_t = jnp.transpose(params["b_cls"])               # (n_class, 1)
    return (w_fused.astype(jnp.bfloat16), b_fused,
            w_cls_t.astype(jnp.bfloat16), b_cls_t.astype(jnp.float32))


def _pick_tile_rows(H, W, max_tile_pixels=4096):
    """Largest divisor of H whose pixel count is lane-aligned and VMEM-friendly."""
    for th in range(H, 0, -1):
        if H % th == 0 and th * W <= max_tile_pixels and (th * W) % 128 == 0:
            return th
    return H  # full image (block == full array dims is always legal)


def suction_icnet_forward(rgb_nchw, ddd_nchw, params, *, tile_rows=None):
    """rgb_nchw, ddd_nchw: (B, Cin, H, W) float32 -> (B, n_class, H, W) float32."""
    B, Cin, H, W = rgb_nchw.shape
    assert ddd_nchw.shape == rgb_nchw.shape
    assert W % 8 == 0, "W must be a multiple of 8 (sublane-preserving reshape)"
    hidden = params["w_rgb"].shape[-1]
    n_class = params["w_cls"].shape[-1]
    K = 9 * 2 * Cin

    if tile_rows is None:
        tile_rows = _pick_tile_rows(H, W)
    assert H % tile_rows == 0
    P = tile_rows * W
    assert P % 128 == 0 or tile_rows == H, "tile pixel count must be lane aligned"
    num_tiles = H // tile_rows

    # NCHW -> NHWC, fuse branches along channels, zero-pad for the 3x3 conv,
    # and ship to the kernel in bf16 (HBM-bandwidth bound path).
    x = jnp.concatenate([jnp.transpose(rgb_nchw, (0, 2, 3, 1)),
                         jnp.transpose(ddd_nchw, (0, 2, 3, 1))], axis=-1)
    x = jnp.pad(x, ((0, 0), (1, 1), (1, 1), (0, 0))).astype(jnp.bfloat16)

    w_fused, b_fused, w_cls_t, b_cls_t = _fuse_params(params)
    kernel = _make_kernel(tile_rows, W, K)

    out = pl.pallas_call(
        kernel,
        out_shape=jax.ShapeDtypeStruct((B, n_class, H * W), jnp.float32),
        grid=(B, num_tiles),
        in_specs=[
            # Whole padded image resident per batch element; the index map
            # ignores t, so it is DMA'd once per image, not once per tile.
            # (bf16 480x640x6 image ~= 3.7 MB -> fits VMEM on v5e/v6e/v7x.)
            pl.BlockSpec((1, H + 2, W + 2, 2 * Cin), lambda b, t: (b, 0, 0, 0)),
            pl.BlockSpec((K, hidden), lambda b, t: (0, 0)),        # w_fused
            pl.BlockSpec((1, hidden), lambda b, t: (0, 0)),        # b_fused
            pl.BlockSpec((n_class, hidden), lambda b, t: (0, 0)),  # w_cls^T
            pl.BlockSpec((n_class, 1), lambda b, t: (0, 0)),       # b_cls^T
        ],
        out_specs=pl.BlockSpec((1, n_class, P), lambda b, t: (b, 0, t)),
        compiler_params=pltpu.CompilerParams(
            dimension_semantics=("parallel", "parallel")),
    )(x, w_fused, b_fused, w_cls_t, b_cls_t)

    # (B, n_class, HW) is already channel-major: a free reshape gives NCHW.
    return out.reshape(B, n_class, H, W)


# ---------------------------------------------------------------------------
# Synthetic parameters + pure-JAX reference (for the self-test)
# ---------------------------------------------------------------------------
def init_params(key, cin=3, hidden=32, n_class=3):
    k1, k2, k3, k4, k5, k6 = jax.random.split(key, 6)
    K = 9 * cin
    s_b = 1.0 / math.sqrt(K)
    s_c = 1.0 / math.sqrt(hidden)
    return {
        "w_rgb": jax.random.normal(k1, (K, hidden), jnp.float32) * s_b,
        "b_rgb": jax.random.normal(k2, (1, hidden), jnp.float32) * 0.1,
        "w_ddd": jax.random.normal(k3, (K, hidden), jnp.float32) * s_b,
        "b_ddd": jax.random.normal(k4, (1, hidden), jnp.float32) * 0.1,
        "w_cls": jax.random.normal(k5, (hidden, n_class), jnp.float32) * s_c,
        "b_cls": jax.random.normal(k6, (1, n_class), jnp.float32) * 0.1,
    }


def _im2col_3x3(x_nhwc):
    B, H, W, C = x_nhwc.shape
    xp = jnp.pad(x_nhwc, ((0, 0), (1, 1), (1, 1), (0, 0)))
    cols = [xp[:, dy:dy + H, dx:dx + W, :] for dy in range(3) for dx in range(3)]
    return jnp.concatenate(cols, axis=-1).reshape(B, H * W, 9 * C)


def reference_forward(rgb_nchw, ddd_nchw, params):
    """Pure-JAX reference (mirrors the kernel's bf16 HBM quantization of inputs/weights)."""
    B, C, H, W = rgb_nchw.shape
    n_class = params["w_cls"].shape[-1]
    hp = jax.lax.Precision.HIGHEST
    q = lambda a: a.astype(jnp.bfloat16).astype(jnp.float32)
    pr = _im2col_3x3(q(jnp.transpose(rgb_nchw, (0, 2, 3, 1))))
    pd = _im2col_3x3(q(jnp.transpose(ddd_nchw, (0, 2, 3, 1))))
    feat = (jnp.matmul(pr, q(params["w_rgb"]), precision=hp) + params["b_rgb"]
            + jnp.matmul(pd, q(params["w_ddd"]), precision=hp) + params["b_ddd"])
    feat = jnp.maximum(feat, 0.0)
    logits = jnp.matmul(feat, q(params["w_cls"]), precision=hp) + params["b_cls"]
    return jnp.transpose(logits.reshape(B, H, W, n_class), (0, 3, 1, 2))


if __name__ == "__main__":
    key = jax.random.PRNGKey(0)
    k_rgb, k_ddd, k_par = jax.random.split(key, 3)

    B, Cin, H, W = 2, 3, 16, 16          # small shapes; RGB + DDD (depth) inputs
    n_class, hidden = 3, 32

    rgb = jax.random.normal(k_rgb, (B, Cin, H, W), jnp.float32)
    ddd = jax.random.normal(k_ddd, (B, Cin, H, W), jnp.float32)
    params = init_params(k_par, cin=Cin, hidden=hidden, n_class=n_class)

    # tile_rows=8 -> 128 pixels (one full lane group) per grid step, 2 tiles/img.
    logits = suction_icnet_forward(rgb, ddd, params, tile_rows=8)
    jax.block_until_ready(logits)
    assert logits.shape == (B, n_class, H, W), logits.shape

    ref = reference_forward(rgb, ddd, params)
    max_err = float(jnp.max(jnp.abs(logits - ref)))
    assert jnp.allclose(logits, ref, atol=5e-3, rtol=5e-3), max_err

    print("KERNEL_OK")
</pallas_src>

<mosaic_0001>
module attributes {stable_mosaic.version = 11 : i64} {
  func.func @kernel(%arg0: i32, %arg1: i32, %arg2: memref<1x18x18x6xbf16, #tpu.memory_space<vmem>>, %arg3: memref<54x32xbf16, #tpu.memory_space<vmem>>, %arg4: memref<1x32xf32, #tpu.memory_space<vmem>>, %arg5: memref<3x32xbf16, #tpu.memory_space<vmem>>, %arg6: memref<3x1xf32, #tpu.memory_space<vmem>>, %arg7: memref<1x3x128xf32, #tpu.memory_space<vmem>>) attributes {dimension_semantics = [#tpu.dimension_semantics<parallel>, #tpu.dimension_semantics<parallel>], iteration_bounds = array<i64: 2, 2>, scalar_prefetch = 0 : i64, scratch_operands = 0 : i64, tpu.core_type = #tpu.core_type<tc>, window_params = [{transform_indices = @transform_0, window_bounds = array<i64: 1, 18, 18, 6>}, {pipeline_mode = #tpu.pipeline_mode<synchronous>, transform_indices = @transform_1, window_bounds = array<i64: 54, 32>}, {pipeline_mode = #tpu.pipeline_mode<synchronous>, transform_indices = @transform_2, window_bounds = array<i64: 1, 32>}, {pipeline_mode = #tpu.pipeline_mode<synchronous>, transform_indices = @transform_3, window_bounds = array<i64: 3, 32>}, {pipeline_mode = #tpu.pipeline_mode<synchronous>, transform_indices = @transform_4, window_bounds = array<i64: 3, 1>}, {transform_indices = @transform_5, window_bounds = array<i64: 1, 3, 128>}]} {
    %c8_i32 = arith.constant 8 : i32
    %0 = arith.muli %arg1, %c8_i32 : i32
    %1 = tpu.assume_multiple %0, 8 : i32
    %c0 = arith.constant 0 : index
    %2 = arith.index_cast %1 : i32 to index
    %c0_0 = arith.constant 0 : index
    %c0_1 = arith.constant 0 : index
    %3 = vector.load %arg2[%c0, %2, %c0_0, %c0_1] : memref<1x18x18x6xbf16, #tpu.memory_space<vmem>>, vector<1x10x18x6xbf16>
    %4 = vector.shape_cast %3 : vector<1x10x18x6xbf16> to vector<10x18x6xbf16>
    %5 = arith.extf %4 : vector<10x18x6xbf16> to vector<10x18x6xf32>
    %6 = vector.extract_strided_slice %5 {offsets = [0, 0, 0], sizes = [8, 16, 6], strides = [1, 1, 1]} : vector<10x18x6xf32> to vector<8x16x6xf32>
    %7 = vector.extract_strided_slice %5 {offsets = [0, 1, 0], sizes = [8, 16, 6], strides = [1, 1, 1]} : vector<10x18x6xf32> to vector<8x16x6xf32>
    %8 = vector.extract_strided_slice %5 {offsets = [0, 2, 0], sizes = [8, 16, 6], strides = [1, 1, 1]} : vector<10x18x6xf32> to vector<8x16x6xf32>
    %9 = vector.extract_strided_slice %5 {offsets = [1, 0, 0], sizes = [8, 16, 6], strides = [1, 1, 1]} : vector<10x18x6xf32> to vector<8x16x6xf32>
    %10 = vector.extract_strided_slice %5 {offsets = [1, 1, 0], sizes = [8, 16, 6], strides = [1, 1, 1]} : vector<10x18x6xf32> to vector<8x16x6xf32>
    %11 = vector.extract_strided_slice %5 {offsets = [1, 2, 0], sizes = [8, 16, 6], strides = [1, 1, 1]} : vector<10x18x6xf32> to vector<8x16x6xf32>
    %12 = vector.extract_strided_slice %5 {offsets = [2, 0, 0], sizes = [8, 16, 6], strides = [1, 1, 1]} : vector<10x18x6xf32> to vector<8x16x6xf32>
    %13 = vector.extract_strided_slice %5 {offsets = [2, 1, 0], sizes = [8, 16, 6], strides = [1, 1, 1]} : vector<10x18x6xf32> to vector<8x16x6xf32>
    %14 = vector.extract_strided_slice %5 {offsets = [2, 2, 0], sizes = [8, 16, 6], strides = [1, 1, 1]} : vector<10x18x6xf32> to vector<8x16x6xf32>
    %15 = tpu.concatenate %6, %7, %8, %9, %10, %11, %12, %13, %14 in 2 : vector<8x16x6xf32>, vector<8x16x6xf32>, vector<8x16x6xf32>, vector<8x16x6xf32>, vector<8x16x6xf32>, vector<8x16x6xf32>, vector<8x16x6xf32>, vector<8x16x6xf32>, vector<8x16x6xf32> -> vector<8x16x54xf32>
    %16 = vector.shape_cast %15 : vector<8x16x54xf32> to vector<128x54xf32>
    %17 = arith.truncf %16 : vector<128x54xf32> to vector<128x54xbf16>
    %c0_2 = arith.constant 0 : index
    %c0_3 = arith.constant 0 : index
    %18 = vector.load %arg3[%c0_2, %c0_3] : memref<54x32xbf16, #tpu.memory_space<vmem>>, vector<54x32xbf16>
    %cst = arith.constant dense<0.000000e+00> : vector<128x32xf32>
    %19 = tpu.matmul %17, %18, %cst {dimension_numbers = #tpu.dot_dimension_numbers<[1], [0], [0], [1], [0, 0, 1, 1], [], []>} : vector<128x54xbf16>, vector<54x32xbf16>, vector<128x32xf32> -> vector<128x32xf32>
    %c0_4 = arith.constant 0 : index
    %c0_5 = arith.constant 0 : index
    %20 = vector.load %arg4[%c0_4, %c0_5] : memref<1x32xf32, #tpu.memory_space<vmem>>, vector<1x32xf32>
    %21 = vector.broadcast %20 : vector<1x32xf32> to vector<128x32xf32>
    %22 = arith.addf %19, %21 : vector<128x32xf32>
    %cst_6 = arith.constant 0.000000e+00 : f32
    %23 = vector.broadcast %cst_6 : f32 to vector<128x32xf32>
    %24 = arith.maximumf %22, %23 : vector<128x32xf32>
    %25 = tpu.transpose %24, [1, 0] : vector<128x32xf32> -> vector<32x128xf32>
    %c0_7 = arith.constant 0 : index
    %c0_8 = arith.constant 0 : index
    %26 = vector.load %arg5[%c0_7, %c0_8] : memref<3x32xbf16, #tpu.memory_space<vmem>>, vector<3x32xbf16>
    %27 = arith.extf %26 : vector<3x32xbf16> to vector<3x32xf32>
    %cst_9 = arith.constant dense<0.000000e+00> : vector<3x128xf32>
    %28 = tpu.matmul %27, %25, %cst_9 {dimension_numbers = #tpu.dot_dimension_numbers<[1], [0], [0], [1], [0, 0, 1, 1], [], []>} : vector<3x32xf32>, vector<32x128xf32>, vector<3x128xf32> -> vector<3x128xf32>
    %c0_10 = arith.constant 0 : index
    %c0_11 = arith.constant 0 : index
    %29 = vector.load %arg6[%c0_10, %c0_11] : memref<3x1xf32, #tpu.memory_space<vmem>>, vector<3x1xf32>
    %30 = vector.broadcast %29 : vector<3x1xf32> to vector<3x128xf32>
    %31 = arith.addf %28, %30 : vector<3x128xf32>
    %c0_12 = arith.constant 0 : index
    %c0_13 = arith.constant 0 : index
    %c0_14 = arith.constant 0 : index
    %32 = vector.load %arg7[%c0_12, %c0_13, %c0_14] : memref<1x3x128xf32, #tpu.memory_space<vmem>>, vector<1x3x128xf32>
    %33 = vector.shape_cast %32 : vector<1x3x128xf32> to vector<3x128xf32>
    %34 = vector.shape_cast %31 : vector<3x128xf32> to vector<1x3x128xf32>
    tpu.vector_store %arg7[%c0_12, %c0_13, %c0_14], %34 {strides = array<i32>} : memref<1x3x128xf32, #tpu.memory_space<vmem>>, vector<1x3x128xf32>,
    return
  }
  func.func @transform_0(%arg0: i32, %arg1: i32) -> (i32, i32, i32, i32) {
    %c0_i32 = arith.constant 0 : i32
    %c0_i32_0 = arith.constant 0 : i32
    %c0_i32_1 = arith.constant 0 : i32
    %c0_i32_2 = arith.constant 0 : i32
    return %arg0, %c0_i32, %c0_i32_0, %c0_i32_1 : i32, i32, i32, i32
  }
  func.func @transform_1(%arg0: i32, %arg1: i32) -> (i32, i32) {
    %c0_i32 = arith.constant 0 : i32
    %c0_i32_0 = arith.constant 0 : i32
    %c0_i32_1 = arith.constant 0 : i32
    return %c0_i32, %c0_i32_0 : i32, i32
  }
  func.func @transform_2(%arg0: i32, %arg1: i32) -> (i32, i32) {
    %c0_i32 = arith.constant 0 : i32
    %c0_i32_0 = arith.constant 0 : i32
    %c0_i32_1 = arith.constant 0 : i32
    return %c0_i32, %c0_i32_0 : i32, i32
  }
  func.func @transform_3(%arg0: i32, %arg1: i32) -> (i32, i32) {
    %c0_i32 = arith.constant 0 : i32
    %c0_i32_0 = arith.constant 0 : i32
    %c0_i32_1 = arith.constant 0 : i32
    return %c0_i32, %c0_i32_0 : i32, i32
  }
  func.func @transform_4(%arg0: i32, %arg1: i32) -> (i32, i32) {
    %c0_i32 = arith.constant 0 : i32
    %c0_i32_0 = arith.constant 0 : i32
    %c0_i32_1 = arith.constant 0 : i32
    return %c0_i32, %c0_i32_0 : i32, i32
  }
  func.func @transform_5(%arg0: i32, %arg1: i32) -> (i32, i32, i32) {
    %c0_i32 = arith.constant 0 : i32
    %c0_i32_0 = arith.constant 0 : i32
    return %arg0, %c0_i32, %arg1 : i32, i32, i32
  }
}

</mosaic_0001>

<llo_original>
// kernel: tpu_custom_call.1
$region0: #{tpu_custom_call.1}
  #allocation0 [shape = 'u32[]', space=smem, size = 0x4, offset = 0x4, fixed_abs, tag = 'smem constant byte address 0x4 - core index']
  #allocation1 [shape = 'u32[144,128]{1,0:T(1,128)}', space=vmem, size = 0x12000, scoped, tag = 'internal scratch']
  %s0 = inlined_call_operand.vmem [shape: bf16[2,18,18,6], index: 0, kind: input, shape index: {}]
  %s1 = inlined_call_operand.vmem [shape: bf16[54,32], index: 1, kind: input, shape index: {}]
  %s2 = inlined_call_operand.vmem [shape: f32[1,32], index: 2, kind: input, shape index: {}]
  %s3 = inlined_call_operand.vmem [shape: bf16[3,32], index: 3, kind: input, shape index: {}]
  %s4 = inlined_call_operand.vmem [shape: f32[3,1], index: 4, kind: input, shape index: {}]
  %s5 = inlined_call_operand.vmem [shape: f32[2,3,256], index: 5, kind: output, shape index: {}]
  %s6 = sld [smem:[#allocation0]]
  $region53: #{tpu_custom_call.1} parent=0
    _
  %s8 = ssub.s32 1, %s6
  %s9 = scalar_select 0, %s8, %s6
  loop: start=0, step=1, limit=6
  $region2: #{tpu_custom_call.1} parent=0 // loop_pre_header
    _
  $region3: #{tpu_custom_call.1} parent=0 // loop_header
    %s11 = sphi 0, %s15
    %p12 = scmp.ge.s32.totalorder %s11, 6
    %s18 = sphi 0, %s30
    %s19 = sphi 0, %s26
    %s20 = sphi 0, %s18
    %s21 = sphi 0, %s19
    %s22 = sphi 0, %s20
    %s23 = sphi 0, %s21
    %s33 = sphi 0, %s35
    %s36 = sphi 0, %s33
    %s37 = sphi 0, %s36
    %s53 = sphi 0, %s37
    %s57 = sphi 0, %s57
    %s59 = sphi 0, %s57
    %s60 = sphi 0, %s59
    %s74 = sphi 0, %s60
    %s78 = sphi 0, %s78
    %s80 = sphi 0, %s78
    %s81 = sphi 0, %s80
    %s95 = sphi 0, %s81
    %s99 = sphi 0, %s99
    %s101 = sphi 0, %s99
    %s102 = sphi 0, %s101
    %s116 = sphi 0, %s102
    %s120 = sphi 0, %s120
    %s122 = sphi 0, %s120
    %s123 = sphi 0, %s122
    %s137 = sphi 0, %s123
    %s145 = sphi 0, %s147
    %s148 = sphi 0, %s145
    %s149 = sphi 0, %s148
    %s165 = sphi 0, %s149
  $region4: #{tpu_custom_call.1} parent=0 // loop_header_branch
    %14 = sbr.rel (%p12) target = $region8
  $region5: #{tpu_custom_call.1} parent=0 // loop_body
    %s16 = ssub.s32 %s11, 1
    %s17 = ssub.s32 %s11, 2
    %s24 = sadd.s32 1, %s19
    %p25 = scmp.ge.s32.totalorder %s24, 2
    %s26 = scalar_select %p25, 0, %s24
    %s27 = sadd.s32 1, %s18
    %s28 = scalar_select %p25, %s27, %s18
    %p29 = scmp.ge.s32.totalorder %s28, 2
    %s30 = scalar_select %p29, 0, %s28
    %s31 = ssub.s32 %s18, %s30
    %p32 = scmp.eq.s32.totalorder %s31, 0
    %s34 = sadd.s32 %s33, 1
    %s35 = scalar_select %p32, %s33, %s34
    %p38 = pneg %p32
    %p39 = scmp.eq.s32.totalorder %s11, 3
    %p40 = por %p38, %p39
    %p41 = scmp.ne.s32.totalorder %s33, %s36
    %p42 = scmp.eq.s32.totalorder %s11, 0
    %p43 = por %p41, %p42
    %p44 = scmp.ne.s32.totalorder %s33, %s36
    %p45 = scmp.eq.s32.totalorder %s16, 3
    %p46 = por %p44, %p45
    %p47 = scmp.ne.s32.totalorder %s36, %s37
    %p48 = scmp.eq.s32.totalorder %s16, 0
    %p49 = por %p47, %p48
    %p50 = scmp.ne.s32.totalorder %s36, %s37
    %p51 = scmp.eq.s32.totalorder %s17, 3
    %p52 = por %p50, %p51
    %p54 = scmp.ne.s32.totalorder %s37, %s53
    %p55 = scmp.eq.s32.totalorder %s17, 0
    %p56 = por %p54, %p55
    %s58 = sadd.s32 %s57, 1
    %p61 = scmp.eq.s32.totalorder %s11, 3
    %p62 = scmp.ne.s32.totalorder %s57, %s59
    %p63 = scmp.eq.s32.totalorder %s11, 0
    %p64 = por %p62, %p63
    %p65 = scmp.ne.s32.totalorder %s57, %s59
    %p66 = scmp.eq.s32.totalorder %s16, 3
    %p67 = por %p65, %p66
    %p68 = scmp.ne.s32.totalorder %s59, %s60
    %p69 = scmp.eq.s32.totalorder %s16, 0
    %p70 = por %p68, %p69
    %p71 = scmp.ne.s32.totalorder %s59, %s60
    %p72 = scmp.eq.s32.totalorder %s17, 3
    %p73 = por %p71, %p72
    %p75 = scmp.ne.s32.totalorder %s60, %s74
    %p76 = scmp.eq.s32.totalorder %s17, 0
    %p77 = por %p75, %p76
    %s79 = sadd.s32 %s78, 1
    %p82 = scmp.eq.s32.totalorder %s11, 3
    %p83 = scmp.ne.s32.totalorder %s78, %s80
    %p84 = scmp.eq.s32.totalorder %s11, 0
    %p85 = por %p83, %p84
    %p86 = scmp.ne.s32.totalorder %s78, %s80
    %p87 = scmp.eq.s32.totalorder %s16, 3
    %p88 = por %p86, %p87
    %p89 = scmp.ne.s32.totalorder %s80, %s81
    %p90 = scmp.eq.s32.totalorder %s16, 0
    %p91 = por %p89, %p90
    %p92 = scmp.ne.s32.totalorder %s80, %s81
    %p93 = scmp.eq.s32.totalorder %s17, 3
    %p94 = por %p92, %p93
    %p96 = scmp.ne.s32.totalorder %s81, %s95
    %p97 = scmp.eq.s32.totalorder %s17, 0
    %p98 = por %p96, %p97
    %s100 = sadd.s32 %s99, 1
    %p103 = scmp.eq.s32.totalorder %s11, 3
    %p104 = scmp.ne.s32.totalorder %s99, %s101
    %p105 = scmp.eq.s32.totalorder %s11, 0
    %p106 = por %p104, %p105
    %p107 = scmp.ne.s32.totalorder %s99, %s101
    %p108 = scmp.eq.s32.totalorder %s16, 3
    %p109 = por %p107, %p108
    %p110 = scmp.ne.s32.totalorder %s101, %s102
    %p111 = scmp.eq.s32.totalorder %s16, 0
    %p112 = por %p110, %p111
    %p113 = scmp.ne.s32.totalorder %s101, %s102
    %p114 = scmp.eq.s32.totalorder %s17, 3
    %p115 = por %p113, %p114
    %p117 = scmp.ne.s32.totalorder %s102, %s116
    %p118 = scmp.eq.s32.totalorder %s17, 0
    %p119 = por %p117, %p118
    %s121 = sadd.s32 %s120, 1
    %p124 = scmp.eq.s32.totalorder %s11, 3
    %p125 = scmp.ne.s32.totalorder %s120, %s122
    %p126 = scmp.eq.s32.totalorder %s11, 0
    %p127 = por %p125, %p126
    %p128 = scmp.ne.s32.totalorder %s120, %s122
    %p129 = scmp.eq.s32.totalorder %s16, 3
    %p130 = por %p128, %p129
    %p131 = scmp.ne.s32.totalorder %s122, %s123
    %p132 = scmp.eq.s32.totalorder %s16, 0
    %p133 = por %p131, %p132
    %p134 = scmp.ne.s32.totalorder %s122, %s123
    %p135 = scmp.eq.s32.totalorder %s17, 3
    %p136 = por %p134, %p135
    %p138 = scmp.ne.s32.totalorder %s123, %s137
    %p139 = scmp.eq.s32.totalorder %s17, 0
    %p140 = por %p138, %p139
    %s141 = ssub.s32 %s18, %s30
    %s142 = ssub.s32 %s19, %s26
    %s143 = sor.u32 %s141, %s142
    %p144 = scmp.eq.s32.totalorder %s143, 0
    %s146 = sadd.s32 %s145, 1
    %s147 = scalar_select %p144, %s145, %s146
    %p150 = pneg %p144
    %p151 = scmp.eq.s32.totalorder %s11, 3
    %p152 = por %p150, %p151
    %p153 = scmp.ne.s32.totalorder %s145, %s148
    %p154 = scmp.eq.s32.totalorder %s11, 0
    %p155 = por %p153, %p154
    %p156 = scmp.ne.s32.totalorder %s145, %s148
    %p157 = scmp.eq.s32.totalorder %s16, 3
    %p158 = por %p156, %p157
    %p159 = scmp.ne.s32.totalorder %s148, %s149
    %p160 = scmp.eq.s32.totalorder %s16, 0
    %p161 = por %p159, %p160
    %p162 = scmp.ne.s32.totalorder %s148, %s149
    %p163 = scmp.eq.s32.totalorder %s17, 3
    %p164 = por %p162, %p163
    %p166 = scmp.ne.s32.totalorder %s149, %s165
    %p167 = scmp.eq.s32.totalorder %s17, 0
    %p168 = por %p166, %p167
    %p169 = scmp.le.s32.totalorder 1, %s11
    %p170 = scmp.lt.s32.totalorder %s11, 5
    %p171 = pnand %p169, %p170
    %p172 = pneg %p171
    // Predicated region
    $region9: #{tpu_custom_call.1} parent=5 // pred_check
      _
    $region10: #{tpu_custom_call.1} parent=5 // pred_check_branch
      %174 = sbr.rel (%p171) target = $region12
    $region11: #{tpu_custom_call.1} parent=5 // pred_region
      %s175 = ssub.s32 %s11, 1
      // Predicated region
      $region13: #{tpu_custom_call.1} parent=11 // pred_check
        %p176 = pneg %p70
      $region14: #{tpu_custom_call.1} parent=11 // pred_check_branch
        %178 = sbr.rel (%p176) target = $region16
      $region15: #{tpu_custom_call.1} parent=11 // pred_region
        _
      $region16: #{tpu_custom_call.1} parent=11 // pred_fallthru
        _
      // Predicated region
      $region17: #{tpu_custom_call.1} parent=11 // pred_check
        %p179 = pneg %p91
      $region18: #{tpu_custom_call.1} parent=11 // pred_check_branch
        %181 = sbr.rel (%p179) target = $region20
      $region19: #{tpu_custom_call.1} parent=11 // pred_region
        _
      $region20: #{tpu_custom_call.1} parent=11 // pred_fallthru
        _
      // Predicated region
      $region21: #{tpu_custom_call.1} parent=11 // pred_check
        %p182 = pneg %p112
      $region22: #{tpu_custom_call.1} parent=11 // pred_check_branch
        %184 = sbr.rel (%p182) target = $region24
      $region23: #{tpu_custom_call.1} parent=11 // pred_region
        _
      $region24: #{tpu_custom_call.1} parent=11 // pred_fallthru
        _
      // Predicated region
      $region25: #{tpu_custom_call.1} parent=11 // pred_check
        %p185 = pneg %p133
      $region26: #{tpu_custom_call.1} parent=11 // pred_check_branch
        %187 = sbr.rel (%p185) target = $region28
      $region27: #{tpu_custom_call.1} parent=11 // pred_region
        _
      $region28: #{tpu_custom_call.1} parent=11 // pred_fallthru
        _
    $region12: #{tpu_custom_call.1} parent=5 // pred_fallthru
      _
    %p188 = scmp.lt.s32.totalorder %s11, 4
    // Predicated region
    $region29: #{tpu_custom_call.1} parent=5 // pred_check
      %p189 = pneg %p188
    $region30: #{tpu_custom_call.1} parent=5 // pred_check_branch
      %191 = sbr.rel (%p189) target = $region32
    $region31: #{tpu_custom_call.1} parent=5 // pred_region
      // Predicated region
      $region33: #{tpu_custom_call.1} parent=31 // pred_check
        %p192 = pneg %p43
      $region34: #{tpu_custom_call.1} parent=31 // pred_check_branch
        %194 = sbr.rel (%p192) target = $region36
      $region35: #{tpu_custom_call.1} parent=31 // pred_region
        %p195 = scmp.lt.s32.totalorder %s18, 1
        %s196 = scalar_select %p195, %s18, 1
        %s197 = smul.addr %s196, 54
        %s198 = smul.addr %s197, 4
        %s199 = scalar_lea.vmem %s0, %s198
      $region36: #{tpu_custom_call.1} parent=31 // pred_fallthru
        _
    $region32: #{tpu_custom_call.1} parent=5 // pred_fallthru
      _
    %p200 = scmp.le.s32.totalorder 1, %s11
    %p201 = scmp.lt.s32.totalorder %s11, 5
    %p202 = pnand %p200, %p201
    %p203 = pneg %p202
    // Predicated region
    $region37: #{tpu_custom_call.1} parent=5 // pred_check
      _
    $region38: #{tpu_custom_call.1} parent=5 // pred_check_branch
      %205 = sbr.rel (%p202) target = $region40
    $region39: #{tpu_custom_call.1} parent=5 // pred_region
      %s206 = ssub.s32 %s11, 1
      %p207 = scmp.lt.s32.totalorder %s20, 1
      %s208 = scalar_select %p207, %s20, 1
      %s209 = smul.addr %s208, 54
      %s210 = smul.addr %s209, 4
      %s211 = scalar_lea.vmem %s0, %s210
      %p212 = pneg %p49
      %p213 = pneg %p46
      %p214 = pneg %p70
      %p215 = pneg %p67
      %p216 = pneg %p91
      %p217 = pneg %p88
      %p218 = pneg %p112
      %p219 = pneg %p109
      %p220 = pneg %p133
      %p221 = pneg %p130
      %p222 = pneg %p161
      %p223 = pneg %p158
      %p224 = scmp.lt.s32.totalorder %s20, 1
      %s225 = scalar_select %p224, %s20, 1
      %p226 = scmp.lt.s32.totalorder %s21, 1
      %s227 = scalar_select %p226, %s21, 1
      %s228 = smul.addr %s225, 2
      %s229 = sadd.s32 %s227, %s228
      %s230 = smul.addr %s229, 4
      %s231 = scalar_lea.vmem %s5, %s230
      %p232 = scmp.lt.s32.totalorder %s20, 1
      %s233 = scalar_select %p232, %s20, 1
      %s234 = smul.addr %s233, 54
      %s235 = smul.addr %s234, 4
      %s236 = scalar_lea.vmem %s0, %s235
      %p237 = scmp.lt.s32.totalorder %s20, 1
      %s238 = scalar_select %p237, %s20, 1
      %p239 = scmp.lt.s32.totalorder %s21, 1
      %s240 = scalar_select %p239, %s21, 1
      %s241 = smul.addr %s238, 2
      %s242 = sadd.s32 %s240, %s241
      %s243 = smul.addr %s242, 4
      %s244 = scalar_lea.vmem %s5, %s243
      %s246 = smul.u32 %s21, 8
      %s247 = smul.u32 %s246, 3
      %s248 = smul.addr %s247, 4
      %s249 = scalar_lea.vmem %s236, %s248
      %v250 = vld [vmem:[%s249] sm:$0xf]
      %v251 = vld [vmem:[%s249 + $0x4] sm:$0xf]
      %v252 = vld [vmem:[%s249 + $0x8] sm:$0x1]
      %v253 = vld [vmem:[%s249 + $0xc] sm:$0xf]
      %v254 = vld [vmem:[%s249 + $0x10] sm:$0xf]
      %v255 = vld [vmem:[%s249 + $0x14] sm:$0x1]
      %v256 = vld [vmem:[%s249 + $0x18] sm:$0xf]
      %v257 = vld [vmem:[%s249 + $0x1c] sm:$0xf]
      %v258 = vld [vmem:[%s249 + $0x20] sm:$0x1]
      %v259 = vld [vmem:[%s249 + $0x24] sm:$0xf]
      %v260 = vld [vmem:[%s249 + $0x28] sm:$0xf]
      %v261 = vld [vmem:[%s249 + $0x2c] sm:$0x1]
      %v262 = vld [vmem:[%s249 + $0x30] sm:$0xf]
      %v263 = vld [vmem:[%s249 + $0x34] sm:$0xf]
      %v264 = vld [vmem:[%s249 + $0x38] sm:$0x1]
      %v265 = vld [vmem:[%s249 + $0x3c] sm:$0xf]
      %v266 = vld [vmem:[%s249 + $0x40] sm:$0xf]
      %v267 = vld [vmem:[%s249 + $0x44] sm:$0x1]
      %v268 = vld [vmem:[%s249 + $0x48] sm:$0xf]
      %v269 = vld [vmem:[%s249 + $0x4c] sm:$0xf]
      %v270 = vld [vmem:[%s249 + $0x50] sm:$0x1]
      %v271 = vld [vmem:[%s249 + $0x54] sm:$0xf]
      %v272 = vld [vmem:[%s249 + $0x58] sm:$0xf]
      %v273 = vld [vmem:[%s249 + $0x5c] sm:$0x1]
      %v274 = vld [vmem:[%s249 + $0x60] sm:$0xf]
      %v275 = vld [vmem:[%s249 + $0x64] sm:$0xf]
      %v276 = vld [vmem:[%s249 + $0x68] sm:$0x1]
      %v277 = vld [vmem:[%s249 + $0x6c] sm:$0xf]
      %v278 = vld [vmem:[%s249 + $0x70] sm:$0xf]
      %v279 = vld [vmem:[%s249 + $0x74] sm:$0x1]
      %v280 = vunpack.c.l.bf16 %v250
      %v281 = vunpack.c.l.bf16 %v251
      %v282 = vunpack.c.l.bf16 %v252
      %v283 = vunpack.c.l.bf16 %v253
      %v284 = vunpack.c.l.bf16 %v254
      %v285 = vunpack.c.l.bf16 %v255
      %v286 = vunpack.c.l.bf16 %v256
      %v287 = vunpack.c.l.bf16 %v257
      %v288 = vunpack.c.l.bf16 %v258
      %v289 = vunpack.c.l.bf16 %v259
      %v290 = vunpack.c.l.bf16 %v260
      %v291 = vunpack.c.l.bf16 %v261
      %v292 = vunpack.c.l.bf16 %v262
      %v293 = vunpack.c.l.bf16 %v263
      %v294 = vunpack.c.l.bf16 %v264
      %v295 = vunpack.c.l.bf16 %v265
      %v296 = vunpack.c.l.bf16 %v266
      %v297 = vunpack.c.l.bf16 %v267
      %v298 = vunpack.c.l.bf16 %v268
      %v299 = vunpack.c.l.bf16 %v269
      %v300 = vunpack.c.l.bf16 %v270
      %v301 = vunpack.c.l.bf16 %v271
      %v302 = vunpack.c.l.bf16 %v272
      %v303 = vunpack.c.l.bf16 %v273
      %v304 = vunpack.c.l.bf16 %v274
      %v305 = vunpack.c.l.bf16 %v275
      %v306 = vunpack.c.l.bf16 %v276
      %v307 = vunpack.c.l.bf16 %v277
      %v308 = vunpack.c.l.bf16 %v278
      %v309 = vunpack.c.l.bf16 %v279
      %vm334 = vcmask 1046528
      %v335 = vrot.slane %v280, 1
      %v336 = vrot.slane %v281, 1
      %v337 = vsel %vm334, %v335, %v336
      %v338 = vrot.slane %v282, 1
      %v339 = vsel %vm334, %v336, %v338
      %v340 = vrot.slane %v283, 1
      %v341 = vrot.slane %v284, 1
      %v342 = vsel %vm334, %v340, %v341
      %v343 = vrot.slane %v285, 1
      %v344 = vsel %vm334, %v341, %v343
      %v345 = vrot.slane %v286, 1
      %v346 = vrot.slane %v287, 1
      %v347 = vsel %vm334, %v345, %v346
      %v348 = vrot.slane %v288, 1
      %v349 = vsel %vm334, %v346, %v348
      %v350 = vrot.slane %v289, 1
      %v351 = vrot.slane %v290, 1
      %v352 = vsel %vm334, %v350, %v351
      %v353 = vrot.slane %v291, 1
      %v354 = vsel %vm334, %v351, %v353
      %v355 = vrot.slane %v292, 1
      %v356 = vrot.slane %v293, 1
      %v357 = vsel %vm334, %v355, %v356
      %v358 = vrot.slane %v294, 1
      %v359 = vsel %vm334, %v356, %v358
      %v360 = vrot.slane %v295, 1
      %v361 = vrot.slane %v296, 1
      %v362 = vsel %vm334, %v360, %v361
      %v363 = vrot.slane %v297, 1
      %v364 = vsel %vm334, %v361, %v363
      %v365 = vrot.slane %v298, 1
      %v366 = vrot.slane %v299, 1
      %v367 = vsel %vm334, %v365, %v366
      %v368 = vrot.slane %v300, 1
      %v369 = vsel %vm334, %v366, %v368
      %v370 = vrot.slane %v301, 1
      %v371 = vrot.slane %v302, 1
      %v372 = vsel %vm334, %v370, %v371
      %v373 = vrot.slane %v303, 1
      %v374 = vsel %vm334, %v371, %v373
      %375 = vrot.lane.b32.xlu0 %v337, 6
      %v376 = vpop.permute.xlu0 %375
      %377 = vrot.lane.b32.xlu0 %v339, 6
      %v378 = vpop.permute.xlu0 %377
      %379 = vrot.lane.b32.xlu0 %v342, 6
      %v380 = vpop.permute.xlu0 %379
      %381 = vrot.lane.b32.xlu0 %v344, 6
      %v382 = vpop.permute.xlu0 %381
      %383 = vrot.lane.b32.xlu0 %v347, 6
      %v384 = vpop.permute.xlu0 %383
      %385 = vrot.lane.b32.xlu0 %v349, 6
      %v386 = vpop.permute.xlu0 %385
      %387 = vrot.lane.b32.xlu0 %v352, 6
      %v388 = vpop.permute.xlu0 %387
      %389 = vrot.lane.b32.xlu0 %v354, 6
      %v390 = vpop.permute.xlu0 %389
      %391 = vrot.lane.b32.xlu0 %v357, 6
      %v392 = vpop.permute.xlu0 %391
      %393 = vrot.lane.b32.xlu0 %v359, 6
      %v394 = vpop.permute.xlu0 %393
      %395 = vrot.lane.b32.xlu0 %v362, 6
      %v396 = vpop.permute.xlu0 %395
      %397 = vrot.lane.b32.xlu0 %v364, 6
      %v398 = vpop.permute.xlu0 %397
      %399 = vrot.lane.b32.xlu0 %v367, 6
      %v400 = vpop.permute.xlu0 %399
      %401 = vrot.lane.b32.xlu0 %v369, 6
      %v402 = vpop.permute.xlu0 %401
      %403 = vrot.lane.b32.xlu0 %v372, 6
      %v404 = vpop.permute.xlu0 %403
      %405 = vrot.lane.b32.xlu0 %v374, 6
      %v406 = vpop.permute.xlu0 %405
      %vm423 = vcmask 1045504
      %v424 = vrot.slane %v280, 2
      %v425 = vrot.slane %v281, 2
      %v426 = vsel %vm423, %v424, %v425
      %v427 = vrot.slane %v282, 2
      %v428 = vsel %vm423, %v425, %v427
      %v429 = vrot.slane %v283, 2
      %v430 = vrot.slane %v284, 2
      %v431 = vsel %vm423, %v429, %v430
      %v432 = vrot.slane %v285, 2
      %v433 = vsel %vm423, %v430, %v432
      %v434 = vrot.slane %v286, 2
      %v435 = vrot.slane %v287, 2
      %v436 = vsel %vm423, %v434, %v435
      %v437 = vrot.slane %v288, 2
      %v438 = vsel %vm423, %v435, %v437
      %v439 = vrot.slane %v289, 2
      %v440 = vrot.slane %v290, 2
      %v441 = vsel %vm423, %v439, %v440
      %v442 = vrot.slane %v291, 2
      %v443 = vsel %vm423, %v440, %v442
      %v444 = vrot.slane %v292, 2
      %v445 = vrot.slane %v293, 2
      %v446 = vsel %vm423, %v444, %v445
      %v447 = vrot.slane %v294, 2
      %v448 = vsel %vm423, %v445, %v447
      %v449 = vrot.slane %v295, 2
      %v450 = vrot.slane %v296, 2
      %v451 = vsel %vm423, %v449, %v450
      %v452 = vrot.slane %v297, 2
      %v453 = vsel %vm423, %v450, %v452
      %v454 = vrot.slane %v298, 2
      %v455 = vrot.slane %v299, 2
      %v456 = vsel %vm423, %v454, %v455
      %v457 = vrot.slane %v300, 2
      %v458 = vsel %vm423, %v455, %v457
      %v459 = vrot.slane %v301, 2
      %v460 = vrot.slane %v302, 2
      %v461 = vsel %vm423, %v459, %v460
      %v462 = vrot.slane %v303, 2
      %v463 = vsel %vm423, %v460, %v462
      %464 = vrot.lane.b32.xlu0 %v426, 12
      %v465 = vpop.permute.xlu0 %464
      %466 = vrot.lane.b32.xlu0 %v428, 12
      %v467 = vpop.permute.xlu0 %466
      %468 = vrot.lane.b32.xlu0 %v431, 12
      %v469 = vpop.permute.xlu0 %468
      %470 = vrot.lane.b32.xlu0 %v433, 12
      %v471 = vpop.permute.xlu0 %470
      %472 = vrot.lane.b32.xlu0 %v436, 12
      %v473 = vpop.permute.xlu0 %472
      %474 = vrot.lane.b32.xlu0 %v438, 12
      %v475 = vpop.permute.xlu0 %474
      %476 = vrot.lane.b32.xlu0 %v441, 12
      %v477 = vpop.permute.xlu0 %476
      %478 = vrot.lane.b32.xlu0 %v443, 12
      %v479 = vpop.permute.xlu0 %478
      %480 = vrot.lane.b32.xlu0 %v446, 12
      %v481 = vpop.permute.xlu0 %480
      %482 = vrot.lane.b32.xlu0 %v448, 12
      %v483 = vpop.permute.xlu0 %482
      %484 = vrot.lane.b32.xlu0 %v451, 12
      %v485 = vpop.permute.xlu0 %484
      %486 = vrot.lane.b32.xlu0 %v453, 12
      %v487 = vpop.permute.xlu0 %486
      %488 = vrot.lane.b32.xlu0 %v456, 12
      %v489 = vpop.permute.xlu0 %488
      %490 = vrot.lane.b32.xlu0 %v458, 12
      %v491 = vpop.permute.xlu0 %490
      %492 = vrot.lane.b32.xlu0 %v461, 12
      %v493 = vpop.permute.xlu0 %492
      %494 = vrot.lane.b32.xlu0 %v463, 12
      %v495 = vpop.permute.xlu0 %494
      %514 = vrot.lane.b32.xlu0 %v283, 18
      %v515 = vpop.permute.xlu0 %514
      %516 = vrot.lane.b32.xlu0 %v284, 18
      %v517 = vpop.permute.xlu0 %516
      %518 = vrot.lane.b32.xlu0 %v286, 18
      %v519 = vpop.permute.xlu0 %518
      %520 = vrot.lane.b32.xlu0 %v287, 18
      %v521 = vpop.permute.xlu0 %520
      %522 = vrot.lane.b32.xlu0 %v289, 18
      %v523 = vpop.permute.xlu0 %522
      %524 = vrot.lane.b32.xlu0 %v290, 18
      %v525 = vpop.permute.xlu0 %524
      %526 = vrot.lane.b32.xlu0 %v292, 18
      %v527 = vpop.permute.xlu0 %526
      %528 = vrot.lane.b32.xlu0 %v293, 18
      %v529 = vpop.permute.xlu0 %528
      %530 = vrot.lane.b32.xlu0 %v295, 18
      %v531 = vpop.permute.xlu0 %530
      %532 = vrot.lane.b32.xlu0 %v296, 18
      %v533 = vpop.permute.xlu0 %532
      %534 = vrot.lane.b32.xlu0 %v298, 18
      %v535 = vpop.permute.xlu0 %534
      %536 = vrot.lane.b32.xlu0 %v299, 18
      %v537 = vpop.permute.xlu0 %536
      %538 = vrot.lane.b32.xlu0 %v301, 18
      %v539 = vpop.permute.xlu0 %538
      %540 = vrot.lane.b32.xlu0 %v302, 18
      %v541 = vpop.permute.xlu0 %540
      %542 = vrot.lane.b32.xlu0 %v304, 18
      %v543 = vpop.permute.xlu0 %542
      %544 = vrot.lane.b32.xlu0 %v305, 18
      %v545 = vpop.permute.xlu0 %544
      %v563 = vrot.slane %v304, 1
      %v564 = vrot.slane %v305, 1
      %v565 = vsel %vm334, %v563, %v564
      %v566 = vrot.slane %v306, 1
      %v567 = vsel %vm334, %v564, %v566
      %568 = vrot.lane.b32.xlu0 %v342, 24
      %v569 = vpop.permute.xlu0 %568
      %570 = vrot.lane.b32.xlu0 %v344, 24
      %v571 = vpop.permute.xlu0 %570
      %572 = vrot.lane.b32.xlu0 %v347, 24
      %v573 = vpop.permute.xlu0 %572
      %574 = vrot.lane.b32.xlu0 %v349, 24
      %v575 = vpop.permute.xlu0 %574
      %576 = vrot.lane.b32.xlu0 %v352, 24
      %v577 = vpop.permute.xlu0 %576
      %578 = vrot.lane.b32.xlu0 %v354, 24
      %v579 = vpop.permute.xlu0 %578
      %580 = vrot.lane.b32.xlu0 %v357, 24
      %v581 = vpop.permute.xlu0 %580
      %582 = vrot.lane.b32.xlu0 %v359, 24
      %v583 = vpop.permute.xlu0 %582
      %584 = vrot.lane.b32.xlu0 %v362, 24
      %v585 = vpop.permute.xlu0 %584
      %586 = vrot.lane.b32.xlu0 %v364, 24
      %v587 = vpop.permute.xlu0 %586
      %588 = vrot.lane.b32.xlu0 %v367, 24
      %v589 = vpop.permute.xlu0 %588
      %590 = vrot.lane.b32.xlu0 %v369, 24
      %v591 = vpop.permute.xlu0 %590
      %592 = vrot.lane.b32.xlu0 %v372, 24
      %v593 = vpop.permute.xlu0 %592
      %594 = vrot.lane.b32.xlu0 %v374, 24
      %v595 = vpop.permute.xlu0 %594
      %596 = vrot.lane.b32.xlu0 %v565, 24
      %v597 = vpop.permute.xlu0 %596
      %598 = vrot.lane.b32.xlu0 %v567, 24
      %v599 = vpop.permute.xlu0 %598
      %v616 = vrot.slane %v304, 2
      %v617 = vrot.slane %v305, 2
      %v618 = vsel %vm423, %v616, %v617
      %v619 = vrot.slane %v306, 2
      %v620 = vsel %vm423, %v617, %v619
      %621 = vrot.lane.b32.xlu0 %v431, 30
      %v622 = vpop.permute.xlu0 %621
      %623 = vrot.lane.b32.xlu0 %v433, 30
      %v624 = vpop.permute.xlu0 %623
      %625 = vrot.lane.b32.xlu0 %v436, 30
      %v626 = vpop.permute.xlu0 %625
      %627 = vrot.lane.b32.xlu0 %v438, 30
      %v628 = vpop.permute.xlu0 %627
      %629 = vrot.lane.b32.xlu0 %v441, 30
      %v630 = vpop.permute.xlu0 %629
      %631 = vrot.lane.b32.xlu0 %v443, 30
      %v632 = vpop.permute.xlu0 %631
      %633 = vrot.lane.b32.xlu0 %v446, 30
      %v634 = vpop.permute.xlu0 %633
      %635 = vrot.lane.b32.xlu0 %v448, 30
      %v636 = vpop.permute.xlu0 %635
      %637 = vrot.lane.b32.xlu0 %v451, 30
      %v638 = vpop.permute.xlu0 %637
      %639 = vrot.lane.b32.xlu0 %v453, 30
      %v640 = vpop.permute.xlu0 %639
      %641 = vrot.lane.b32.xlu0 %v456, 30
      %v642 = vpop.permute.xlu0 %641
      %643 = vrot.lane.b32.xlu0 %v458, 30
      %v644 = vpop.permute.xlu0 %643
      %645 = vrot.lane.b32.xlu0 %v461, 30
      %v646 = vpop.permute.xlu0 %645
      %647 = vrot.lane.b32.xlu0 %v463, 30
      %v648 = vpop.permute.xlu0 %647
      %649 = vrot.lane.b32.xlu0 %v618, 30
      %v650 = vpop.permute.xlu0 %649
      %651 = vrot.lane.b32.xlu0 %v620, 30
      %v652 = vpop.permute.xlu0 %651
      %671 = vrot.lane.b32.xlu0 %v286, 36
      %v672 = vpop.permute.xlu0 %671
      %673 = vrot.lane.b32.xlu0 %v287, 36
      %v674 = vpop.permute.xlu0 %673
      %675 = vrot.lane.b32.xlu0 %v289, 36
      %v676 = vpop.permute.xlu0 %675
      %677 = vrot.lane.b32.xlu0 %v290, 36
      %v678 = vpop.permute.xlu0 %677
      %679 = vrot.lane.b32.xlu0 %v292, 36
      %v680 = vpop.permute.xlu0 %679
      %681 = vrot.lane.b32.xlu0 %v293, 36
      %v682 = vpop.permute.xlu0 %681
      %683 = vrot.lane.b32.xlu0 %v295, 36
      %v684 = vpop.permute.xlu0 %683
      %685 = vrot.lane.b32.xlu0 %v296, 36
      %v686 = vpop.permute.xlu0 %685
      %687 = vrot.lane.b32.xlu0 %v298, 36
      %v688 = vpop.permute.xlu0 %687
      %689 = vrot.lane.b32.xlu0 %v299, 36
      %v690 = vpop.permute.xlu0 %689
      %691 = vrot.lane.b32.xlu0 %v301, 36
      %v692 = vpop.permute.xlu0 %691
      %693 = vrot.lane.b32.xlu0 %v302, 36
      %v694 = vpop.permute.xlu0 %693
      %695 = vrot.lane.b32.xlu0 %v304, 36
      %v696 = vpop.permute.xlu0 %695
      %697 = vrot.lane.b32.xlu0 %v305, 36
      %v698 = vpop.permute.xlu0 %697
      %699 = vrot.lane.b32.xlu0 %v307, 36
      %v700 = vpop.permute.xlu0 %699
      %701 = vrot.lane.b32.xlu0 %v308, 36
      %v702 = vpop.permute.xlu0 %701
      %v720 = vrot.slane %v307, 1
      %v721 = vrot.slane %v308, 1
      %v722 = vsel %vm334, %v720, %v721
      %v723 = vrot.slane %v309, 1
      %v724 = vsel %vm334, %v721, %v723
      %725 = vrot.lane.b32.xlu0 %v347, 42
      %v726 = vpop.permute.xlu0 %725
      %727 = vrot.lane.b32.xlu0 %v349, 42
      %v728 = vpop.permute.xlu0 %727
      %729 = vrot.lane.b32.xlu0 %v352, 42
      %v730 = vpop.permute.xlu0 %729
      %731 = vrot.lane.b32.xlu0 %v354, 42
      %v732 = vpop.permute.xlu0 %731
      %733 = vrot.lane.b32.xlu0 %v357, 42
      %v734 = vpop.permute.xlu0 %733
      %735 = vrot.lane.b32.xlu0 %v359, 42
      %v736 = vpop.permute.xlu0 %735
      %737 = vrot.lane.b32.xlu0 %v362, 42
      %v738 = vpop.permute.xlu0 %737
      %739 = vrot.lane.b32.xlu0 %v364, 42
      %v740 = vpop.permute.xlu0 %739
      %741 = vrot.lane.b32.xlu0 %v367, 42
      %v742 = vpop.permute.xlu0 %741
      %743 = vrot.lane.b32.xlu0 %v369, 42
      %v744 = vpop.permute.xlu0 %743
      %745 = vrot.lane.b32.xlu0 %v372, 42
      %v746 = vpop.permute.xlu0 %745
      %747 = vrot.lane.b32.xlu0 %v374, 42
      %v748 = vpop.permute.xlu0 %747
      %749 = vrot.lane.b32.xlu0 %v565, 42
      %v750 = vpop.permute.xlu0 %749
      %751 = vrot.lane.b32.xlu0 %v567, 42
      %v752 = vpop.permute.xlu0 %751
      %753 = vrot.lane.b32.xlu0 %v722, 42
      %v754 = vpop.permute.xlu0 %753
      %755 = vrot.lane.b32.xlu0 %v724, 42
      %v756 = vpop.permute.xlu0 %755
      %v773 = vrot.slane %v307, 2
      %v774 = vrot.slane %v308, 2
      %v775 = vsel %vm423, %v773, %v774
      %v776 = vrot.slane %v309, 2
      %v777 = vsel %vm423, %v774, %v776
      %778 = vrot.lane.b32.xlu0 %v436, 48
      %v779 = vpop.permute.xlu0 %778
      %780 = vrot.lane.b32.xlu0 %v438, 48
      %v781 = vpop.permute.xlu0 %780
      %782 = vrot.lane.b32.xlu0 %v441, 48
      %v783 = vpop.permute.xlu0 %782
      %784 = vrot.lane.b32.xlu0 %v443, 48
      %v785 = vpop.permute.xlu0 %784
      %786 = vrot.lane.b32.xlu0 %v446, 48
      %v787 = vpop.permute.xlu0 %786
      %788 = vrot.lane.b32.xlu0 %v448, 48
      %v789 = vpop.permute.xlu0 %788
      %790 = vrot.lane.b32.xlu0 %v451, 48
      %v791 = vpop.permute.xlu0 %790
      %792 = vrot.lane.b32.xlu0 %v453, 48
      %v793 = vpop.permute.xlu0 %792
      %794 = vrot.lane.b32.xlu0 %v456, 48
      %v795 = vpop.permute.xlu0 %794
      %796 = vrot.lane.b32.xlu0 %v458, 48
      %v797 = vpop.permute.xlu0 %796
      %798 = vrot.lane.b32.xlu0 %v461, 48
      %v799 = vpop.permute.xlu0 %798
      %800 = vrot.lane.b32.xlu0 %v463, 48
      %v801 = vpop.permute.xlu0 %800
      %802 = vrot.lane.b32.xlu0 %v618, 48
      %v803 = vpop.permute.xlu0 %802
      %804 = vrot.lane.b32.xlu0 %v620, 48
      %v805 = vpop.permute.xlu0 %804
      %806 = vrot.lane.b32.xlu0 %v775, 48
      %v807 = vpop.permute.xlu0 %806
      %808 = vrot.lane.b32.xlu0 %v777, 48
      %v809 = vpop.permute.xlu0 %808
      %vm826 = vcmask 48128
      %v827 = vsel %vm826, %v280, %v376
      %v828 = vsel %vm826, %v281, %v378
      %v829 = vsel %vm826, %v283, %v380
      %v830 = vsel %vm826, %v284, %v382
      %v831 = vsel %vm826, %v286, %v384
      %v832 = vsel %vm826, %v287, %v386
      %v833 = vsel %vm826, %v289, %v388
      %v834 = vsel %vm826, %v290, %v390
      %v835 = vsel %vm826, %v292, %v392
      %v836 = vsel %vm826, %v293, %v394
      %v837 = vsel %vm826, %v295, %v396
      %v838 = vsel %vm826, %v296, %v398
      %v839 = vsel %vm826, %v298, %v400
      %v840 = vsel %vm826, %v299, %v402
      %v841 = vsel %vm826, %v301, %v404
      %v842 = vsel %vm826, %v302, %v406
      %vm843 = vcmask 97280
      %v844 = vsel %vm843, %v827, %v465
      %v845 = vsel %vm843, %v828, %v467
      %v846 = vsel %vm843, %v829, %v469
      %v847 = vsel %vm843, %v830, %v471
      %v848 = vsel %vm843, %v831, %v473
      %v849 = vsel %vm843, %v832, %v475
      %v850 = vsel %vm843, %v833, %v477
      %v851 = vsel %vm843, %v834, %v479
      %v852 = vsel %vm843, %v835, %v481
      %v853 = vsel %vm843, %v836, %v483
      %v854 = vsel %vm843, %v837, %v485
      %v855 = vsel %vm843, %v838, %v487
      %v856 = vsel %vm843, %v839, %v489
      %v857 = vsel %vm843, %v840, %v491
      %v858 = vsel %vm843, %v841, %v493
      %v859 = vsel %vm843, %v842, %v495
      %vm860 = vcmask 146432
      %v861 = vsel %vm860, %v844, %v515
      %v862 = vsel %vm860, %v845, %v517
      %v863 = vsel %vm860, %v846, %v519
      %v864 = vsel %vm860, %v847, %v521
      %v865 = vsel %vm860, %v848, %v523
      %v866 = vsel %vm860, %v849, %v525
      %v867 = vsel %vm860, %v850, %v527
      %v868 = vsel %vm860, %v851, %v529
      %v869 = vsel %vm860, %v852, %v531
      %v870 = vsel %vm860, %v853, %v533
      %v871 = vsel %vm860, %v854, %v535
      %v872 = vsel %vm860, %v855, %v537
      %v873 = vsel %vm860, %v856, %v539
      %v874 = vsel %vm860, %v857, %v541
      %v875 = vsel %vm860, %v858, %v543
      %v876 = vsel %vm860, %v859, %v545
      %vm877 = vcmask 195584
      %v878 = vsel %vm877, %v861, %v569
      %v879 = vsel %vm877, %v862, %v571
      %v880 = vsel %vm877, %v863, %v573
      %v881 = vsel %vm877, %v864, %v575
      %v882 = vsel %vm877, %v865, %v577
      %v883 = vsel %vm877, %v866, %v579
      %v884 = vsel %vm877, %v867, %v581
      %v885 = vsel %vm877, %v868, %v583
      %v886 = vsel %vm877, %v869, %v585
      %v887 = vsel %vm877, %v870, %v587
      %v888 = vsel %vm877, %v871, %v589
      %v889 = vsel %vm877, %v872, %v591
      %v890 = vsel %vm877, %v873, %v593
      %v891 = vsel %vm877, %v874, %v595
      %v892 = vsel %vm877, %v875, %v597
      %v893 = vsel %vm877, %v876, %v599
      %vm894 = vcmask 244736
      %v895 = vsel %vm894, %v878, %v622
      %v896 = vsel %vm894, %v879, %v624
      %v897 = vsel %vm894, %v880, %v626
      %v898 = vsel %vm894, %v881, %v628
      %v899 = vsel %vm894, %v882, %v630
      %v900 = vsel %vm894, %v883, %v632
      %v901 = vsel %vm894, %v884, %v634
      %v902 = vsel %vm894, %v885, %v636
      %v903 = vsel %vm894, %v886, %v638
      %v904 = vsel %vm894, %v887, %v640
      %v905 = vsel %vm894, %v888, %v642
      %v906 = vsel %vm894, %v889, %v644
      %v907 = vsel %vm894, %v890, %v646
      %v908 = vsel %vm894, %v891, %v648
      %v909 = vsel %vm894, %v892, %v650
      %v910 = vsel %vm894, %v893, %v652
      %vm911 = vcmask 293888
      %v912 = vsel %vm911, %v895, %v672
      %v913 = vsel %vm911, %v896, %v674
      %v914 = vsel %vm911, %v897, %v676
      %v915 = vsel %vm911, %v898, %v678
      %v916 = vsel %vm911, %v899, %v680
      %v917 = vsel %vm911, %v900, %v682
      %v918 = vsel %vm911, %v901, %v684
      %v919 = vsel %vm911, %v902, %v686
      %v920 = vsel %vm911, %v903, %v688
      %v921 = vsel %vm911, %v904, %v690
      %v922 = vsel %vm911, %v905, %v692
      %v923 = vsel %vm911, %v906, %v694
      %v924 = vsel %vm911, %v907, %v696
      %v925 = vsel %vm911, %v908, %v698
      %v926 = vsel %vm911, %v909, %v700
      %v927 = vsel %vm911, %v910, %v702
      %vm928 = vcmask 343040
      %v929 = vsel %vm928, %v912, %v726
      %v930 = vsel %vm928, %v913, %v728
      %v931 = vsel %vm928, %v914, %v730
      %v932 = vsel %vm928, %v915, %v732
      %v933 = vsel %vm928, %v916, %v734
      %v934 = vsel %vm928, %v917, %v736
      %v935 = vsel %vm928, %v918, %v738
      %v936 = vsel %vm928, %v919, %v740
      %v937 = vsel %vm928, %v920, %v742
      %v938 = vsel %vm928, %v921, %v744
      %v939 = vsel %vm928, %v922, %v746
      %v940 = vsel %vm928, %v923, %v748
      %v941 = vsel %vm928, %v924, %v750
      %v942 = vsel %vm928, %v925, %v752
      %v943 = vsel %vm928, %v926, %v754
      %v944 = vsel %vm928, %v927, %v756
      %vm945 = vcmask 392192
      %v946 = vsel %vm945, %v929, %v779
      %v947 = vsel %vm945, %v930, %v781
      %v948 = vsel %vm945, %v931, %v783
      %v949 = vsel %vm945, %v932, %v785
      %v950 = vsel %vm945, %v933, %v787
      %v951 = vsel %vm945, %v934, %v789
      %v952 = vsel %vm945, %v935, %v791
      %v953 = vsel %vm945, %v936, %v793
      %v954 = vsel %vm945, %v937, %v795
      %v955 = vsel %vm945, %v938, %v797
      %v956 = vsel %vm945, %v939, %v799
      %v957 = vsel %vm945, %v940, %v801
      %v958 = vsel %vm945, %v941, %v803
      %v959 = vsel %vm945, %v942, %v805
      %v960 = vsel %vm945, %v943, %v807
      %v961 = vsel %vm945, %v944, %v809
      %v962 = vpack.c.bf16 %v947, %v946
      %v963 = vpack.c.bf16 %v949, %v948
      %v964 = vpack.c.bf16 %v951, %v950
      %v965 = vpack.c.bf16 %v953, %v952
      %v966 = vpack.c.bf16 %v955, %v954
      %v967 = vpack.c.bf16 %v957, %v956
      %v968 = vpack.c.bf16 %v959, %v958
      %v969 = vpack.c.bf16 %v961, %v960
      %v970 = vld [vmem:[%s1] sm:$0xf]
      %v971 = vld [vmem:[%s1 + $0x4] sm:$0xf]
      %v972 = vld [vmem:[%s1 + $0x8] sm:$0xf]
      %v973 = vld [vmem:[%s1 + $0xc] sm:$0xf]
      %v974 = vld [vmem:[%s1 + $0x10] sm:$0xf]
      %v975 = vld [vmem:[%s1 + $0x14] sm:$0xf]
      %v976 = vld [vmem:[%s1 + $0x18] sm:$0x7]
      %v977 = vld [vmem:[%s2] sm:$0x1]
      %v979 = vlaneseq
      %v980 = vshrl.u32 %v979, 7
      %v981 = vsub.s32 0, %v980
      %v982 = vrot.slane %v977, %v981
      %v991 = vunpack.c.l.b16 %v970
      %v992 = vunpack.c.l.b16 %v971
      %v993 = vunpack.c.l.b16 %v972
      %v994 = vunpack.c.l.b16 %v973
      %v995 = vunpack.c.l.b16 %v974
      %v996 = vunpack.c.l.b16 %v975
      %v997 = vunpack.c.l.b16 %v976
      %v998 = vpack.c.b16 %v992, %v991
      %v999 = vpack.c.b16 %v994, %v993
      %v1000 = vpack.c.b16 %v996, %v995
      %v1001 = vpack.c.b16 %v997, %v997
      %vm1005 = vcmask 441344
      %v1007 = vsel %vm1005, %v962, 0
      %v1010 = vsel %vm1005, %v963, 0
      %v1013 = vsel %vm1005, %v964, 0
      %v1016 = vsel %vm1005, %v965, 0
      %v1019 = vsel %vm1005, %v966, 0
      %v1022 = vsel %vm1005, %v967, 0
      %v1025 = vsel %vm1005, %v968, 0
      %v1028 = vsel %vm1005, %v969, 0
      %vm1030 = vcmask 1042432
      %v1032 = vsel %vm1030, %v1001, 0
      %1034 = vmatprep.subr.bf16.mxu0 0
      %1035 = vmatpush1.bf16.msra.mxu0 0
      %1036 = vmatprep.subr.bf16.mxu0 0
      %1037 = vmatpush1.bf16.msra.mxu0 0
      %1038 = vmatprep.subr.bf16.mxu0 0
      %1039 = vmatpush1.bf16.msra.mxu0 0
      %1040 = vmatprep.subr.bf16.mxu0 0
      %1041 = vmatpush1.bf16.msra.mxu0 0
      %1042 = vmatprep.subr.bf16.mxu0 0
      %1043 = vmatpush1.bf16.msra.mxu0 %v1032
      %1044 = vmatprep.subr.bf16.mxu0 0
      %1045 = vmatpush1.bf16.msra.mxu0 %v1000
      %1046 = vmatprep.subr.bf16.mxu0 0
      %1047 = vmatpush1.bf16.msra.mxu0 %v999
      %1048 = vmatprep.subr.bf16.mxu0 0
      %1049 = vmatpush1.bf16.msra.mxu0 %v998
      %1050 = vmatprep.subr.bf16.mxu0 0
      %1051 = vmatpush2.bf16.msra.mxu0 0
      %1052 = vmatprep.subr.bf16.mxu0 0
      %1053 = vmatpush2.bf16.msra.mxu0 0
      %1054 = vmatprep.subr.bf16.mxu0 0
      %1055 = vmatpush2.bf16.msra.mxu0 0
      %1056 = vmatprep.subr.bf16.mxu0 0
      %1057 = vmatpush2.bf16.msra.mxu0 0
      %1058 = vmatprep.subr.bf16.mxu0 0
      %1059 = vmatpush2.bf16.msra.mxu0 0
      %1060 = vmatprep.subr.bf16.mxu0 0
      %1061 = vmatpush2.bf16.msra.mxu0 0
      %1062 = vmatprep.subr.bf16.mxu0 0
      %1063 = vmatpush2.bf16.msra.mxu0 0
      %1064 = vmatprep.subr.bf16.mxu0 0
      %1065 = vmatpush2.bf16.msra.mxu0 0
      %1066 = vmatprep.mubr.bf16.mxu0 0
      %1067 = vmatmul.mubr.bf16.gmra.mxu0 %v1007
      %v1068 = vpop.f32.mrf.mxu0
      %v1069 = vadd.f32 %v982, %v1068
      %v1070 = vpop.f32.mrf.mxu0
      %v1071 = vpop.f32.mrf.mxu0
      %v1072 = vadd.f32 %v982, %v1071
      %v1073 = vpop.f32.mrf.mxu0
      %1074 = vmatprep.mubr.bf16.mxu0 0
      %1075 = vmatmul.mubr.bf16.gmra.mxu0 %v1010
      %v1076 = vpop.f32.mrf.mxu0
      %v1077 = vadd.f32 %v982, %v1076
      %v1078 = vpop.f32.mrf.mxu0
      %v1079 = vpop.f32.mrf.mxu0
      %v1080 = vadd.f32 %v982, %v1079
      %v1081 = vpop.f32.mrf.mxu0
      %1082 = vmatprep.mubr.bf16.mxu0 0
      %1083 = vmatmul.mubr.bf16.gmra.mxu0 %v1013
      %v1084 = vpop.f32.mrf.mxu0
      %v1085 = vadd.f32 %v982, %v1084
      %v1086 = vpop.f32.mrf.mxu0
      %v1087 = vpop.f32.mrf.mxu0
      %v1088 = vadd.f32 %v982, %v1087
      %v1089 = vpop.f32.mrf.mxu0
      %1090 = vmatprep.mubr.bf16.mxu0 0
      %1091 = vmatmul.mubr.bf16.gmra.mxu0 %v1016
      %v1092 = vpop.f32.mrf.mxu0
      %v1093 = vadd.f32 %v982, %v1092
      %v1094 = vpop.f32.mrf.mxu0
      %v1095 = vpop.f32.mrf.mxu0
      %v1096 = vadd.f32 %v982, %v1095
      %v1097 = vpop.f32.mrf.mxu0
      %1098 = vmatprep.mubr.bf16.mxu0 0
      %1099 = vmatmul.mubr.bf16.gmra.mxu0 %v1019
      %v1100 = vpop.f32.mrf.mxu0
      %v1101 = vadd.f32 %v982, %v1100
      %v1102 = vpop.f32.mrf.mxu0
      %v1103 = vpop.f32.mrf.mxu0
      %v1104 = vadd.f32 %v982, %v1103
      %v1105 = vpop.f32.mrf.mxu0
      %1106 = vmatprep.mubr.bf16.mxu0 0
      %1107 = vmatmul.mubr.bf16.gmra.mxu0 %v1022
      %v1108 = vpop.f32.mrf.mxu0
      %v1109 = vadd.f32 %v982, %v1108
      %v1110 = vpop.f32.mrf.mxu0
      %v1111 = vpop.f32.mrf.mxu0
      %v1112 = vadd.f32 %v982, %v1111
      %v1113 = vpop.f32.mrf.mxu0
      %1114 = vmatprep.mubr.bf16.mxu0 0
      %1115 = vmatmul.mubr.bf16.gmra.mxu0 %v1025
      %v1116 = vpop.f32.mrf.mxu0
      %v1117 = vadd.f32 %v982, %v1116
      %v1118 = vpop.f32.mrf.mxu0
      %v1119 = vpop.f32.mrf.mxu0
      %v1120 = vadd.f32 %v982, %v1119
      %v1121 = vpop.f32.mrf.mxu0
      %1122 = vmatprep.mubr.bf16.mxu0 0
      %1123 = vmatmul.mubr.bf16.gmra.mxu0 %v1028
      %v1124 = vpop.f32.mrf.mxu0
      %v1125 = vadd.f32 %v982, %v1124
      %v1126 = vpop.f32.mrf.mxu0
      %v1127 = vpop.f32.mrf.mxu0
      %v1128 = vadd.f32 %v982, %v1127
      %v1129 = vpop.f32.mrf.mxu0
      %1130 = vdwg.mxu0
      %v1131 = vmax.f32 %v1069, 0.0
      %v1132 = vmax.f32 %v1072, 0.0
      %v1133 = vmax.f32 %v1077, 0.0
      %v1134 = vmax.f32 %v1080, 0.0
      %v1135 = vmax.f32 %v1085, 0.0
      %v1136 = vmax.f32 %v1088, 0.0
      %v1137 = vmax.f32 %v1093, 0.0
      %v1138 = vmax.f32 %v1096, 0.0
      %v1139 = vmax.f32 %v1101, 0.0
      %v1140 = vmax.f32 %v1104, 0.0
      %v1141 = vmax.f32 %v1109, 0.0
      %v1142 = vmax.f32 %v1112, 0.0
      %v1143 = vmax.f32 %v1117, 0.0
      %v1144 = vmax.f32 %v1120, 0.0
      %v1145 = vmax.f32 %v1125, 0.0
      %v1146 = vmax.f32 %v1128, 0.0
      %v1147 = vld [vmem:[%s3] sm:$0x3]
      %v1148 = vunpack.c.l.bf16 %v1147
      %v1149 = vld [vmem:[%s4] sm:$0x7]
      %1151 = vset.pattern.permute.xlu0 0
      %1152 = vperm.xlu0 %1151, %v1149
      %v1153 = vpop.permute.xlu0 %1152
      %vm1155 = vcmask 261120
      %v1157 = vsel %vm1155, %v1148, 0
      %v1160 = vsel %vm1155, %v1131, 0
      %v1163 = vsel %vm1155, %v1132, 0
      %v1166 = vsel %vm1155, %v1133, 0
      %v1169 = vsel %vm1155, %v1134, 0
      %v1172 = vsel %vm1155, %v1135, 0
      %v1175 = vsel %vm1155, %v1136, 0
      %v1178 = vsel %vm1155, %v1137, 0
      %v1181 = vsel %vm1155, %v1138, 0
      %v1184 = vsel %vm1155, %v1139, 0
      %v1187 = vsel %vm1155, %v1140, 0
      %v1190 = vsel %vm1155, %v1141, 0
      %v1193 = vsel %vm1155, %v1142, 0
      %v1196 = vsel %vm1155, %v1143, 0
      %v1199 = vsel %vm1155, %v1144, 0
      %v1202 = vsel %vm1155, %v1145, 0
      %v1205 = vsel %vm1155, %v1146, 0
      %1207 = vmatprep.subr.mxu0 0.0
      %1208 = vmatpush1.xpose.msra.mxu0 %v1205
      %1209 = vmatprep.subr.mxu0 0.0
      %1210 = vmatpush1.xpose.msra.mxu0 %v1202
      %1211 = vmatprep.subr.mxu0 0.0
      %1212 = vmatpush1.xpose.msra.mxu0 %v1199
      %1213 = vmatprep.subr.mxu0 0.0
      %1214 = vmatpush1.xpose.msra.mxu0 %v1196
      %1215 = vmatprep.subr.mxu0 0.0
      %1216 = vmatpush1.xpose.msra.mxu0 %v1193
      %1217 = vmatprep.subr.mxu0 0.0
      %1218 = vmatpush1.xpose.msra.mxu0 %v1190
      %1219 = vmatprep.subr.mxu0 0.0
      %1220 = vmatpush1.xpose.msra.mxu0 %v1187
      %1221 = vmatprep.subr.mxu0 0.0
      %1222 = vmatpush1.xpose.msra.mxu0 %v1184
      %1223 = vmatprep.subr.mxu0 0.0
      %1224 = vmatpush1.xpose.msra.mxu0 %v1181
      %1225 = vmatprep.subr.mxu0 0.0
      %1226 = vmatpush1.xpose.msra.mxu0 %v1178
      %1227 = vmatprep.subr.mxu0 0.0
      %1228 = vmatpush1.xpose.msra.mxu0 %v1175
      %1229 = vmatprep.subr.mxu0 0.0
      %1230 = vmatpush1.xpose.msra.mxu0 %v1172
      %1231 = vmatprep.subr.mxu0 0.0
      %1232 = vmatpush1.xpose.msra.mxu0 %v1169
      %1233 = vmatprep.subr.mxu0 0.0
      %1234 = vmatpush1.xpose.msra.mxu0 %v1166
      %1235 = vmatprep.subr.mxu0 0.0
      %1236 = vmatpush1.xpose.msra.mxu0 %v1163
      %1237 = vmatprep.subr.mxu0 0.0
      %1238 = vmatpush1.xpose.msra.mxu0 %v1160
      %1239 = vmatprep.subr.mxu0 0.0
      %1240 = vmatpush2.xpose.msra.mxu0 0.0
      %1241 = vmatprep.subr.mxu0 0.0
      %1242 = vmatpush2.xpose.msra.mxu0 0.0
      %1243 = vmatprep.subr.mxu0 0.0
      %1244 = vmatpush2.xpose.msra.mxu0 0.0
      %1245 = vmatprep.subr.mxu0 0.0
      %1246 = vmatpush2.xpose.msra.mxu0 0.0
      %1247 = vmatprep.subr.mxu0 0.0
      %1248 = vmatpush2.xpose.msra.mxu0 0.0
      %1249 = vmatprep.subr.mxu0 0.0
      %1250 = vmatpush2.xpose.msra.mxu0 0.0
      %1251 = vmatprep.subr.mxu0 0.0
      %1252 = vmatpush2.xpose.msra.mxu0 0.0
      %1253 = vmatprep.subr.mxu0 0.0
      %1254 = vmatpush2.xpose.msra.mxu0 0.0
      %1255 = vmatprep.subr.mxu0 0.0
      %1256 = vmatpush2.xpose.msra.mxu0 0.0
      %1257 = vmatprep.subr.mxu0 0.0
      %1258 = vmatpush2.xpose.msra.mxu0 0.0
      %1259 = vmatprep.subr.mxu0 0.0
      %1260 = vmatpush2.xpose.msra.mxu0 0.0
      %1261 = vmatprep.subr.mxu0 0.0
      %1262 = vmatpush2.xpose.msra.mxu0 0.0
      %1263 = vmatprep.subr.mxu0 0.0
      %1264 = vmatpush2.xpose.msra.mxu0 0.0
      %1265 = vmatprep.subr.mxu0 0.0
      %1266 = vmatpush2.xpose.msra.mxu0 0.0
      %1267 = vmatprep.subr.mxu0 0.0
      %1268 = vmatpush2.xpose.msra.mxu0 0.0
      %1269 = vmatprep.subr.mxu0 0.0
      %1270 = vmatpush2.xpose.msra.mxu0 0.0
      %1271 = vmatprep.mubr.f32.mxu0 0.0
      %1272 = vmatmul.mubr.f32.gmra.mxu0 %v1157
      %v1273 = vpop.f32.mrf.mxu0
      %v1274 = vadd.f32 %v1153, %v1273
      %v1275 = vpop.f32.mrf.mxu0
      %1276 = vdwg.mxu0
      %1277 = vst [vmem:[%s244] sm:$0x7] %v1274
      %p1278 = scmp.lt.s32.totalorder %s20, 1
      %s1279 = scalar_select %p1278, %s20, 1
      %p1280 = scmp.lt.s32.totalorder %s21, 1
      %s1281 = scalar_select %p1280, %s21, 1
      %s1282 = smul.addr %s1279, 2
      %s1283 = sadd.s32 %s1281, %s1282
      %s1284 = smul.addr %s1283, 4
      %s1285 = scalar_lea.vmem %s5, %s1284
      // Predicated region
      $region41: #{tpu_custom_call.1} parent=39 // pred_check
        %p1286 = pneg %p158
      $region42: #{tpu_custom_call.1} parent=39 // pred_check_branch
        %1288 = sbr.rel (%p1286) target = $region44
      $region43: #{tpu_custom_call.1} parent=39 // pred_region
        _
      $region44: #{tpu_custom_call.1} parent=39 // pred_fallthru
        _
    $region40: #{tpu_custom_call.1} parent=5 // pred_fallthru
      _
    %p1289 = scmp.le.s32.totalorder 2, %s11
    // Predicated region
    $region45: #{tpu_custom_call.1} parent=5 // pred_check
      %p1290 = pneg %p1289
    $region46: #{tpu_custom_call.1} parent=5 // pred_check_branch
      %1292 = sbr.rel (%p1290) target = $region48
    $region47: #{tpu_custom_call.1} parent=5 // pred_region
      %s1293 = ssub.s32 %s11, 2
      // Predicated region
      $region49: #{tpu_custom_call.1} parent=47 // pred_check
        %p1294 = pneg %p164
      $region50: #{tpu_custom_call.1} parent=47 // pred_check_branch
        %1296 = sbr.rel (%p1294) target = $region52
      $region51: #{tpu_custom_call.1} parent=47 // pred_region
        %p1297 = scmp.lt.s32.totalorder %s22, 1
        %s1298 = scalar_select %p1297, %s22, 1
        %p1299 = scmp.lt.s32.totalorder %s23, 1
        %s1300 = scalar_select %p1299, %s23, 1
        %s1301 = smul.addr %s1298, 2
        %s1302 = sadd.s32 %s1300, %s1301
        %s1303 = smul.addr %s1302, 4
        %s1304 = scalar_lea.vmem %s5, %s1303
      $region52: #{tpu_custom_call.1} parent=47 // pred_fallthru
        _
    $region48: #{tpu_custom_call.1} parent=5 // pred_fallthru
      _
  $region6: #{tpu_custom_call.1} parent=0 // loop_footer
    %s15 = sadd.s32 1, %s11
  $region7: #{tpu_custom_call.1} parent=0 // loop_footer_branch
    %10 = sbr.rel target = $region3
  $region8: #{tpu_custom_call.1} parent=0 // loop_exit
    _

</llo_original>
